<compile_context>
chip_gen: v7x
topology: tpu7x:2x2x1
jax: 0.10.0
libtpu: 0.0.40
codegen_flags: <defaults>
</compile_context>

<pallas_src>
import functools

import numpy as np
import jax
import jax.numpy as jnp
from jax.experimental import pallas as pl
from jax.experimental.pallas import tpu as pltpu


# ---------------------------------------------------------------------------
# Host-side glue: Haar wavelet-packet operators (built once, memoized).
# ---------------------------------------------------------------------------
def _round_up(n, m):
    return ((n + m - 1) // m) * m


def _graycode_paths(level):
    """pywt get_level(..., order='freq') node path ordering (graycode)."""
    order = ['a', 'd']
    for _ in range(level - 1):
        order = ['a' + p for p in order] + ['d' + p for p in reversed(order)]
    return order


def _haar_synthesis_matrix(level):
    """M[j, n]: contribution of natural-order leaf node n to output sample j of a block."""
    n = 2 ** level
    inv_sqrt2 = 1.0 / np.sqrt(2.0)
    M = np.zeros((n, n), dtype=np.float64)
    for i in range(n):
        nodes = [np.array([1.0 if j == i else 0.0]) for j in range(n)]
        for _ in range(level):
            nxt = []
            for p in range(len(nodes) // 2):
                a, d = nodes[2 * p], nodes[2 * p + 1]
                x = np.empty(2 * a.shape[0])
                x[0::2] = (a + d) * inv_sqrt2   # pywt db1: x[2k]   = (cA+cD)/sqrt(2)
                x[1::2] = (a - d) * inv_sqrt2   #           x[2k+1] = (cA-cD)/sqrt(2)
                nxt.append(x)
            nodes = nxt
        M[:, i] = nodes[0]
    return M


@functools.lru_cache(maxsize=None)
def _build_operators(level, leaf_len, conv_w, threshold):
    """Constant operators for the fused forward pass (memoized; host work runs once).

    Flat coefficient layout: t = f*L + k  (f: freq-ordered leaf node, k: position).
    Flat signal layout:      s = k*N + j  (k: block, j: sample within block).

      [coeffs | pre-bias] = x_flat   @ W_in    (Haar WPT + per-node conv, fused)
      thr                 = |gated|  @ S       (per-node mean(|.|) * threshold)
      out_flat            = gated    @ A_syn   (inverse Haar WPT, transpose folded in)
    """
    N = 2 ** level
    L = leaf_len
    D = N * L
    M = _haar_synthesis_matrix(level)                   # natural-order synthesis
    paths = _graycode_paths(level)
    perm = [int(p.replace('a', '0').replace('d', '1'), 2) for p in paths]
    Wfreq = M[:, perm]                                  # x_block[j] = sum_f W[j,f] c_freq[f]

    eyeL = np.eye(L)
    # A_syn[f*L+k, k'*N+j] = Wfreq[j, f] * delta(k, k')  -> folds the output reshape/transpose.
    A_syn = np.einsum('jf,kK->fkKj', Wfreq, eyeL).reshape(D, D)
    A_ana = A_syn.T                                     # orthogonal -> exact analysis

    # Per-node 3-tap conv (PyTorch cross-correlation, zero padding=1) as a banded matrix.
    w0, w1, w2 = conv_w
    conv_block = (w1 * eyeL
                  + w0 * np.diag(np.ones(L - 1), 1)     # pre[k] += w0 * c[k-1]
                  + w2 * np.diag(np.ones(L - 1), -1))   # pre[k] += w2 * c[k+1]
    K = np.kron(np.eye(N), conv_block)

    # Fold conv into the analysis matmul: one (D, 2D) weight, one fewer serial matmul.
    W_in = np.concatenate([A_ana, A_ana @ K], axis=1)

    # Per-node mean(|.|) * threshold, broadcast back over the node.
    S = np.kron(np.eye(N), np.full((L, L), float(threshold) / L))

    return tuple(jnp.asarray(a, jnp.float32) for a in (W_in, S, A_syn))


# ---------------------------------------------------------------------------
# Pallas kernel: fused WPT+conv -> gate -> threshold -> inverse WPT.
# ---------------------------------------------------------------------------
def _wgn_kernel(x_ref, w_in_ref, s_ref, a_syn_ref, out_ref, *, conv_bias, split):
    x = x_ref[...]                                                      # (TC, D)
    cp = jnp.dot(x, w_in_ref[...], preferred_element_type=jnp.float32)  # (TC, 2D)
    coeffs = cp[:, :split]
    pre = cp[:, split:] + conv_bias
    gate = jax.nn.sigmoid(pre)                                          # EUP
    gated = coeffs * gate
    absg = jnp.abs(gated)
    thr = jnp.dot(absg, s_ref[...], preferred_element_type=jnp.float32)
    gated = jnp.where(absg < thr, jnp.float32(0.0), gated)              # hard threshold
    out_ref[...] = jnp.dot(gated, a_syn_ref[...], preferred_element_type=jnp.float32)


def make_wavelet_gated_net(conv_w, conv_b, threshold, level=3, *, block_c=256):
    """Init-time factory: folds conv/threshold params into constant operators ONCE and
    returns a jitted forward fn: x (C, S) float32 -> reconstructed signal (C, S)."""
    conv_w = tuple(float(v) for v in np.asarray(conv_w))   # one-time host sync (init only)
    conv_b = float(conv_b)
    threshold = float(threshold)

    def forward(x):
        C, S = x.shape
        N = 2 ** level
        assert S % N == 0, (S, N)
        L = S // N
        D = S
        W_in, Smat, A_syn = _build_operators(level, L, conv_w, threshold)

        tc = min(block_c, _round_up(C, 8))      # sublane-aligned channel tile
        Cp = _round_up(C, tc)
        if Cp != C:
            x = jnp.pad(x, ((0, Cp - C), (0, 0)))
        grid = (Cp // tc,)

        flops = 8 * Cp * D * D + 8 * Cp * D
        bytes_accessed = (2 * Cp * D + 4 * D * D) * 4

        out = pl.pallas_call(
            functools.partial(_wgn_kernel, conv_bias=conv_b, split=D),
            out_shape=jax.ShapeDtypeStruct((Cp, D), jnp.float32),
            grid_spec=pltpu.PrefetchScalarGridSpec(
                num_scalar_prefetch=0,
                grid=grid,
                in_specs=[
                    pl.BlockSpec((tc, D), lambda i: (i, 0)),        # x tile (pipelined)
                    pl.BlockSpec((D, 2 * D), lambda i: (0, 0)),     # resident weights
                    pl.BlockSpec((D, D), lambda i: (0, 0)),
                    pl.BlockSpec((D, D), lambda i: (0, 0)),
                ],
                out_specs=pl.BlockSpec((tc, D), lambda i: (i, 0)),
            ),
            compiler_params=pltpu.CompilerParams(
                dimension_semantics=("parallel",),
                vmem_limit_bytes=32 << 20,
            ),
            cost_estimate=pl.CostEstimate(flops=flops,
                                          transcendentals=Cp * D,
                                          bytes_accessed=bytes_accessed),
        )(x, W_in, Smat, A_syn)
        return out[:C]

    return jax.jit(forward)


# ---------------------------------------------------------------------------
# Pure-JAX reference (independent butterfly Haar WPT/IWPT + per-node gating).
# ---------------------------------------------------------------------------
def ref_wavelet_gated_net(x, conv_w, conv_b, threshold, level):
    C, S = x.shape
    N = 2 ** level
    s2 = np.float32(1.0 / np.sqrt(2.0))

    # Forward Haar WPT (natural order).
    nodes = [x]
    for _ in range(level):
        nxt = []
        for nd in nodes:
            a = (nd[:, 0::2] + nd[:, 1::2]) * s2
            d = (nd[:, 0::2] - nd[:, 1::2]) * s2
            nxt += [a, d]
        nodes = nxt
    coeffs_nat = jnp.stack(nodes, axis=1)                      # (C, N, L)
    paths = _graycode_paths(level)
    perm = np.array([int(p.replace('a', '0').replace('d', '1'), 2) for p in paths])
    coeffs = coeffs_nat[:, perm, :]                            # freq order

    # AdaptiveGatedUnit.
    w0, w1, w2 = [jnp.float32(v) for v in np.asarray(conv_w)]
    zero = jnp.zeros((C, N, 1), x.dtype)
    cm1 = jnp.concatenate([zero, coeffs[:, :, :-1]], axis=-1)
    cp1 = jnp.concatenate([coeffs[:, :, 1:], zero], axis=-1)
    pre = w0 * cm1 + w1 * coeffs + w2 * cp1 + jnp.float32(conv_b)
    gate = 1.0 / (1.0 + jnp.exp(-pre))
    gated = coeffs * gate
    thr = jnp.mean(jnp.abs(gated), axis=-1, keepdims=True) * jnp.float32(threshold)
    margin = jnp.abs(jnp.abs(gated) - thr)                     # borderline detector for the test
    gated = jnp.where(jnp.abs(gated) < thr, 0.0, gated)

    # Inverse Haar WPT.
    inv = np.argsort(perm)
    g_nat = gated[:, inv, :]
    nodes = [g_nat[:, n, :] for n in range(N)]
    for _ in range(level):
        nxt = []
        for p in range(len(nodes) // 2):
            a, d = nodes[2 * p], nodes[2 * p + 1]
            xr = jnp.stack([(a + d) * s2, (a - d) * s2], axis=-1).reshape(C, -1)
            nxt.append(xr)
        nodes = nxt
    return nodes[0], margin


if __name__ == "__main__":
    level = 3
    C = 4                 # channels
    N = 2 ** level        # leaf nodes per channel (freq order)
    L = 16                # coefficients per leaf node
    S = N * L             # signal length = 128

    key = jax.random.PRNGKey(0)
    kx, kw, kb = jax.random.split(key, 3)
    x = jax.random.normal(kx, (C, S), dtype=jnp.float32)
    bound = 1.0 / np.sqrt(3.0)   # PyTorch Conv1d(1,1,3) default init bound
    conv_w = jax.random.uniform(kw, (3,), dtype=jnp.float32, minval=-bound, maxval=bound)
    conv_b = float(jax.random.uniform(kb, (), dtype=jnp.float32, minval=-bound, maxval=bound))
    threshold = 0.1              # nn.Parameter init in AdaptiveGatedUnit

    forward = make_wavelet_gated_net(conv_w, conv_b, threshold, level=level)
    out = jax.block_until_ready(forward(x))
    assert out.shape == (C, S), out.shape
    # second call: memoized operators + jit cache -> no host-side rebuild
    out = jax.block_until_ready(forward(x))

    ref, margin = ref_wavelet_gated_net(x, conv_w, conv_b, threshold, level)

    # Robust comparison: exclude output blocks whose coefficients sit within float32
    # noise of the hard-threshold boundary (discrete keep/zero decision could flip).
    safe_block = jnp.all(margin > 1e-4, axis=1)           # (C, L): block k safe for channel c
    safe = jnp.repeat(safe_block, N, axis=-1)             # (C, S), sample s = k*N + j
    assert float(jnp.mean(safe.astype(jnp.float32))) > 0.9
    max_err = float(jnp.max(jnp.where(safe, jnp.abs(out - ref), 0.0)))
    assert max_err <= 1e-4, max_err

    print("KERNEL_OK")
</pallas_src>

<mosaic_0001>
module attributes {stable_mosaic.version = 11 : i64} {
  func.func @_wgn_kernel(%arg0: i32, %arg1: memref<8x128xf32, #tpu.memory_space<vmem>>, %arg2: memref<128x256xf32, #tpu.memory_space<vmem>>, %arg3: memref<128x128xf32, #tpu.memory_space<vmem>>, %arg4: memref<128x128xf32, #tpu.memory_space<vmem>>, %arg5: memref<8x128xf32, #tpu.memory_space<vmem>>) attributes {dimension_semantics = [#tpu.dimension_semantics<parallel>], iteration_bounds = array<i64: 1>, scalar_prefetch = 0 : i64, scratch_operands = 0 : i64, tpu.core_type = #tpu.core_type<tc>, window_params = [{transform_indices = @transform_0, window_bounds = array<i64: 8, 128>}, {pipeline_mode = #tpu.pipeline_mode<synchronous>, transform_indices = @transform_1, window_bounds = array<i64: 128, 256>}, {pipeline_mode = #tpu.pipeline_mode<synchronous>, transform_indices = @transform_2, window_bounds = array<i64: 128, 128>}, {pipeline_mode = #tpu.pipeline_mode<synchronous>, transform_indices = @transform_3, window_bounds = array<i64: 128, 128>}, {transform_indices = @transform_4, window_bounds = array<i64: 8, 128>}]} {
    %c0 = arith.constant 0 : index
    %c0_0 = arith.constant 0 : index
    %0 = vector.load %arg1[%c0, %c0_0] : memref<8x128xf32, #tpu.memory_space<vmem>>, vector<8x128xf32>
    %c0_1 = arith.constant 0 : index
    %c0_2 = arith.constant 0 : index
    %1 = vector.load %arg2[%c0_1, %c0_2] : memref<128x256xf32, #tpu.memory_space<vmem>>, vector<128x256xf32>
    %cst = arith.constant dense<0.000000e+00> : vector<8x256xf32>
    %2 = tpu.matmul %0, %1, %cst {dimension_numbers = #tpu.dot_dimension_numbers<[1], [0], [0], [1], [0, 0, 1, 1], [], []>} : vector<8x128xf32>, vector<128x256xf32>, vector<8x256xf32> -> vector<8x256xf32>
    %3 = vector.extract_strided_slice %2 {offsets = [0, 0], sizes = [8, 128], strides = [1, 1]} : vector<8x256xf32> to vector<8x128xf32>
    %4 = vector.extract_strided_slice %2 {offsets = [0, 128], sizes = [8, 128], strides = [1, 1]} : vector<8x256xf32> to vector<8x128xf32>
    %cst_3 = arith.constant 0.464708626 : f32
    %5 = vector.broadcast %cst_3 : f32 to vector<8x128xf32>
    %6 = arith.addf %4, %5 : vector<8x128xf32>
    %7 = arith.negf %6 : vector<8x128xf32>
    %8 = math.exp %7 : vector<8x128xf32>
    %cst_4 = arith.constant 1.000000e+00 : f32
    %9 = vector.broadcast %cst_4 : f32 to vector<8x128xf32>
    %10 = arith.addf %9, %8 : vector<8x128xf32>
    %11 = arith.divf %9, %10 : vector<8x128xf32>
    %12 = arith.mulf %3, %11 : vector<8x128xf32>
    %13 = math.absf %12 : vector<8x128xf32>
    %c0_5 = arith.constant 0 : index
    %c0_6 = arith.constant 0 : index
    %14 = vector.load %arg3[%c0_5, %c0_6] : memref<128x128xf32, #tpu.memory_space<vmem>>, vector<128x128xf32>
    %cst_7 = arith.constant dense<0.000000e+00> : vector<8x128xf32>
    %15 = tpu.matmul %13, %14, %cst_7 {dimension_numbers = #tpu.dot_dimension_numbers<[1], [0], [0], [1], [0, 0, 1, 1], [], []>} : vector<8x128xf32>, vector<128x128xf32>, vector<8x128xf32> -> vector<8x128xf32>
    %16 = arith.cmpf olt, %13, %15 : vector<8x128xf32>
    %cst_8 = arith.constant 0.000000e+00 : f32
    %17 = vector.broadcast %cst_8 : f32 to vector<8x128xf32>
    %18 = arith.select %16, %17, %12 : vector<8x128xi1>, vector<8x128xf32>
    %c0_9 = arith.constant 0 : index
    %c0_10 = arith.constant 0 : index
    %19 = vector.load %arg4[%c0_9, %c0_10] : memref<128x128xf32, #tpu.memory_space<vmem>>, vector<128x128xf32>
    %cst_11 = arith.constant dense<0.000000e+00> : vector<8x128xf32>
    %20 = tpu.matmul %18, %19, %cst_11 {dimension_numbers = #tpu.dot_dimension_numbers<[1], [0], [0], [1], [0, 0, 1, 1], [], []>} : vector<8x128xf32>, vector<128x128xf32>, vector<8x128xf32> -> vector<8x128xf32>
    %c0_12 = arith.constant 0 : index
    %c0_13 = arith.constant 0 : index
    %21 = vector.load %arg5[%c0_12, %c0_13] : memref<8x128xf32, #tpu.memory_space<vmem>>, vector<8x128xf32>
    tpu.vector_store %arg5[%c0_12, %c0_13], %20 {strides = array<i32>} : memref<8x128xf32, #tpu.memory_space<vmem>>, vector<8x128xf32>,
    return
  }
  func.func @transform_0(%arg0: i32) -> (i32, i32) {
    %c0_i32 = arith.constant 0 : i32
    %c0_i32_0 = arith.constant 0 : i32
    return %arg0, %c0_i32 : i32, i32
  }
  func.func @transform_1(%arg0: i32) -> (i32, i32) {
    %c0_i32 = arith.constant 0 : i32
    %c0_i32_0 = arith.constant 0 : i32
    %c0_i32_1 = arith.constant 0 : i32
    return %c0_i32, %c0_i32_0 : i32, i32
  }
  func.func @transform_2(%arg0: i32) -> (i32, i32) {
    %c0_i32 = arith.constant 0 : i32
    %c0_i32_0 = arith.constant 0 : i32
    %c0_i32_1 = arith.constant 0 : i32
    return %c0_i32, %c0_i32_0 : i32, i32
  }
  func.func @transform_3(%arg0: i32) -> (i32, i32) {
    %c0_i32 = arith.constant 0 : i32
    %c0_i32_0 = arith.constant 0 : i32
    %c0_i32_1 = arith.constant 0 : i32
    return %c0_i32, %c0_i32_0 : i32, i32
  }
  func.func @transform_4(%arg0: i32) -> (i32, i32) {
    %c0_i32 = arith.constant 0 : i32
    %c0_i32_0 = arith.constant 0 : i32
    return %arg0, %c0_i32 : i32, i32
  }
}

</mosaic_0001>

<llo_original>
// kernel: forward.1
$region0: #{forward.1}
  #allocation0 [shape = 'u32[]', space=smem, size = 0x4, offset = 0x4, fixed_abs, tag = 'smem constant byte address 0x4 - core index']
  #allocation1 [shape = 'u32[144,128]{1,0:T(1,128)}', space=vmem, size = 0x12000, scoped, tag = 'internal scratch']
  %s0 = inlined_call_operand.vmem [shape: f32[8,128], index: 0, kind: input, shape index: {}]
  %s1 = inlined_call_operand.hbm [shape: f32[128,256], index: 1, kind: input, shape index: {}]
  %s2 = inlined_call_operand.hbm [shape: f32[128,128], index: 2, kind: input, shape index: {}]
  %s3 = inlined_call_operand.hbm [shape: f32[128,128], index: 3, kind: input, shape index: {}]
  %s4 = inlined_call_operand.vmem [shape: f32[8,128], index: 4, kind: output, shape index: {}]
  %s5 = sld [smem:[#allocation0]]
  $region38: #{forward.1} parent=0
    _
  %s7 = ssub.s32 1, %s5
  %s8 = scalar_select 0, %s7, %s5
  $region1: #{forward.1} parent=0
    #allocation2 [shape = 'u8[131072]{0}', space=vmem, size = 0x20000, scoped, tag = 'input window, operand 1, single buffered']
    #allocation3 [shape = 's32[1]{0}', space=sflag, size = 0x4, scoped, tag = 'scoped memory for forward.1']
    #allocation4 [shape = 'u8[65536]{0}', space=vmem, size = 0x10000, scoped, tag = 'input window, operand 2, single buffered']
    #allocation5 [shape = 's32[1]{0}', space=sflag, size = 0x4, scoped, tag = 'scoped memory for forward.1']
    #allocation6 [shape = 'u8[65536]{0}', space=vmem, size = 0x10000, scoped, tag = 'input window, operand 3, single buffered']
    %9 = vsyncpa [#allocation3], 0
    %10 = vsyncpa [#allocation5], 0
    // Predicated region
    $region2: #{forward.1} parent=1 // pred_check
      _
    $region3: #{forward.1} parent=1 // pred_check_branch
      %12 = sbr.rel (0) target = $region5
    $region4: #{forward.1} parent=1 // pred_region
      _
    $region5: #{forward.1} parent=1 // pred_fallthru
      _
    // Predicated region
    $region6: #{forward.1} parent=1 // pred_check
      _
    $region7: #{forward.1} parent=1 // pred_check_branch
      %14 = sbr.rel (0) target = $region9
    $region8: #{forward.1} parent=1 // pred_region
      %s16 = ssub.s32 4096, 4096
      %17 = vsyncadd [#allocation3], %s16
      %s18 = sshll.u32 [#allocation2], 4
      %s19 = int_to_ptr.vmem [resolvable:$true] %s18
      %24 = dma.hbm_to_vmem [thread:$0]  %s1, 4096, %s19, [#allocation3], 256, 256, 16
    $region9: #{forward.1} parent=1 // pred_fallthru
      _
    // Predicated region
    $region10: #{forward.1} parent=1 // pred_check
      _
    $region11: #{forward.1} parent=1 // pred_check_branch
      %26 = sbr.rel (0) target = $region13
    $region12: #{forward.1} parent=1 // pred_region
      %s28 = ssub.s32 2048, 2048
      %29 = vsyncadd [#allocation5], %s28
      %s30 = sshll.u32 [#allocation4], 4
      %s31 = int_to_ptr.vmem [resolvable:$true] %s30
      %36 = dma.hbm_to_vmem [thread:$0]  %s2, 2048, %s31, [#allocation5], 128, 128, 8
    $region13: #{forward.1} parent=1 // pred_fallthru
      _
    // Predicated region
    $region14: #{forward.1} parent=1 // pred_check
      _
    $region15: #{forward.1} parent=1 // pred_check_branch
      %38 = sbr.rel (0) target = $region17
    $region16: #{forward.1} parent=1 // pred_region
      %s40 = ssub.s32 2048, 2048
      %41 = vsyncadd [#allocation5], %s40
      %s42 = sshll.u32 [#allocation6], 4
      %s43 = int_to_ptr.vmem [resolvable:$true] %s42
      %48 = dma.hbm_to_vmem [thread:$0]  %s3, 2048, %s43, [#allocation5], 128, 128, 8
    $region17: #{forward.1} parent=1 // pred_fallthru
      _
    // Predicated region
    $region18: #{forward.1} parent=1 // pred_check
      _
    $region19: #{forward.1} parent=1 // pred_check_branch
      %50 = sbr.rel (0) target = $region21
    $region20: #{forward.1} parent=1 // pred_region
      %51 = dma.done [#allocation3], 4096
    $region21: #{forward.1} parent=1 // pred_fallthru
      _
    // Predicated region
    $region22: #{forward.1} parent=1 // pred_check
      _
    $region23: #{forward.1} parent=1 // pred_check_branch
      %53 = sbr.rel (0) target = $region25
    $region24: #{forward.1} parent=1 // pred_region
      %54 = dma.done [#allocation5], 2048
    $region25: #{forward.1} parent=1 // pred_fallthru
      _
    // Predicated region
    $region26: #{forward.1} parent=1 // pred_check
      _
    $region27: #{forward.1} parent=1 // pred_check_branch
      %56 = sbr.rel (0) target = $region29
    $region28: #{forward.1} parent=1 // pred_region
      %57 = dma.done [#allocation5], 2048
    $region29: #{forward.1} parent=1 // pred_fallthru
      _
    %v58 = vld [vmem:[%s0] sm:$0xff]
    %v59 = vld [vmem:[#allocation2] sm:$0xff]
    %v60 = vld [vmem:[#allocation2 + $0x8] sm:$0xff]
    %v61 = vld [vmem:[#allocation2 + $0x10] sm:$0xff]
    %v62 = vld [vmem:[#allocation2 + $0x18] sm:$0xff]
    %v63 = vld [vmem:[#allocation2 + $0x20] sm:$0xff]
    %v64 = vld [vmem:[#allocation2 + $0x28] sm:$0xff]
    %v65 = vld [vmem:[#allocation2 + $0x30] sm:$0xff]
    %v66 = vld [vmem:[#allocation2 + $0x38] sm:$0xff]
    %v67 = vld [vmem:[#allocation2 + $0x40] sm:$0xff]
    %v68 = vld [vmem:[#allocation2 + $0x48] sm:$0xff]
    %v69 = vld [vmem:[#allocation2 + $0x50] sm:$0xff]
    %v70 = vld [vmem:[#allocation2 + $0x58] sm:$0xff]
    %v71 = vld [vmem:[#allocation2 + $0x60] sm:$0xff]
    %v72 = vld [vmem:[#allocation2 + $0x68] sm:$0xff]
    %v73 = vld [vmem:[#allocation2 + $0x70] sm:$0xff]
    %v74 = vld [vmem:[#allocation2 + $0x78] sm:$0xff]
    %v75 = vld [vmem:[#allocation2 + $0x80] sm:$0xff]
    %v76 = vld [vmem:[#allocation2 + $0x88] sm:$0xff]
    %v77 = vld [vmem:[#allocation2 + $0x90] sm:$0xff]
    %v78 = vld [vmem:[#allocation2 + $0x98] sm:$0xff]
    %v79 = vld [vmem:[#allocation2 + $0xa0] sm:$0xff]
    %v80 = vld [vmem:[#allocation2 + $0xa8] sm:$0xff]
    %v81 = vld [vmem:[#allocation2 + $0xb0] sm:$0xff]
    %v82 = vld [vmem:[#allocation2 + $0xb8] sm:$0xff]
    %v83 = vld [vmem:[#allocation2 + $0xc0] sm:$0xff]
    %v84 = vld [vmem:[#allocation2 + $0xc8] sm:$0xff]
    %v85 = vld [vmem:[#allocation2 + $0xd0] sm:$0xff]
    %v86 = vld [vmem:[#allocation2 + $0xd8] sm:$0xff]
    %v87 = vld [vmem:[#allocation2 + $0xe0] sm:$0xff]
    %v88 = vld [vmem:[#allocation2 + $0xe8] sm:$0xff]
    %v89 = vld [vmem:[#allocation2 + $0xf0] sm:$0xff]
    %v90 = vld [vmem:[#allocation2 + $0xf8] sm:$0xff]
    %91 = vmatprep.subr.mxu0 %v60
    %92 = vmatpush1.msra.mxu0 %v59
    %93 = vmatprep.subr.mxu0 %v62
    %94 = vmatpush1.msra.mxu0 %v61
    %95 = vmatprep.subr.mxu0 %v64
    %96 = vmatpush1.msra.mxu0 %v63
    %97 = vmatprep.subr.mxu0 %v66
    %98 = vmatpush1.msra.mxu0 %v65
    %99 = vmatprep.subr.mxu0 %v68
    %100 = vmatpush1.msra.mxu0 %v67
    %101 = vmatprep.subr.mxu0 %v70
    %102 = vmatpush1.msra.mxu0 %v69
    %103 = vmatprep.subr.mxu0 %v72
    %104 = vmatpush1.msra.mxu0 %v71
    %105 = vmatprep.subr.mxu0 %v74
    %106 = vmatpush1.msra.mxu0 %v73
    %107 = vmatprep.subr.mxu0 %v76
    %108 = vmatpush1.msra.mxu0 %v75
    %109 = vmatprep.subr.mxu0 %v78
    %110 = vmatpush1.msra.mxu0 %v77
    %111 = vmatprep.subr.mxu0 %v80
    %112 = vmatpush1.msra.mxu0 %v79
    %113 = vmatprep.subr.mxu0 %v82
    %114 = vmatpush1.msra.mxu0 %v81
    %115 = vmatprep.subr.mxu0 %v84
    %116 = vmatpush1.msra.mxu0 %v83
    %117 = vmatprep.subr.mxu0 %v86
    %118 = vmatpush1.msra.mxu0 %v85
    %119 = vmatprep.subr.mxu0 %v88
    %120 = vmatpush1.msra.mxu0 %v87
    %121 = vmatprep.subr.mxu0 %v90
    %122 = vmatpush1.msra.mxu0 %v89
    %123 = vmatprep.subr.mxu0 0.0
    %124 = vmatpush1.msra.mxu0 0.0
    %125 = vmatprep.subr.mxu0 0.0
    %126 = vmatpush1.msra.mxu0 0.0
    %127 = vmatprep.subr.mxu0 0.0
    %128 = vmatpush1.msra.mxu0 0.0
    %129 = vmatprep.subr.mxu0 0.0
    %130 = vmatpush1.msra.mxu0 0.0
    %131 = vmatprep.subr.mxu0 0.0
    %132 = vmatpush1.msra.mxu0 0.0
    %133 = vmatprep.subr.mxu0 0.0
    %134 = vmatpush1.msra.mxu0 0.0
    %135 = vmatprep.subr.mxu0 0.0
    %136 = vmatpush1.msra.mxu0 0.0
    %137 = vmatprep.subr.mxu0 0.0
    %138 = vmatpush1.msra.mxu0 0.0
    %139 = vmatprep.subr.mxu0 0.0
    %140 = vmatpush1.msra.mxu0 0.0
    %141 = vmatprep.subr.mxu0 0.0
    %142 = vmatpush1.msra.mxu0 0.0
    %143 = vmatprep.subr.mxu0 0.0
    %144 = vmatpush1.msra.mxu0 0.0
    %145 = vmatprep.subr.mxu0 0.0
    %146 = vmatpush1.msra.mxu0 0.0
    %147 = vmatprep.subr.mxu0 0.0
    %148 = vmatpush1.msra.mxu0 0.0
    %149 = vmatprep.subr.mxu0 0.0
    %150 = vmatpush1.msra.mxu0 0.0
    %151 = vmatprep.subr.mxu0 0.0
    %152 = vmatpush1.msra.mxu0 0.0
    %153 = vmatprep.subr.mxu0 0.0
    %154 = vmatpush1.msra.mxu0 0.0
    %155 = vmatprep.mubr.f32.mxu0 0.0
    %156 = vmatmul.mubr.f32.gmra.mrb[0].mxu0 %v58
    %v157 = vpop.f32.mrb[0].mxu0
    %v158 = vadd.f32 0.0, %v157
    %v159 = vpop.f32.mrb[0].mxu0
    %v160 = vadd.f32 0.0, %v159
    %161 = vdwg.mxu0
    %v162 = vadd.f32 %v160, 0.46470863
    %v163 = vxor.u32 %v162, 2147483648
    %v164 = vmul.f32 %v163, 1.442695
    %v165 = vpow.pop %v164
    %v166 = vadd.f32 %v165, 1.0
    %v167 = vrcp.pop %v166
    %v168 = vmul.f32 1.0, %v167
    %v169 = vmul.f32 %v158, %v168
    %v170 = vand.u32 2147483647, %v169
    %v171 = vld [vmem:[#allocation4] sm:$0xff]
    %v172 = vld [vmem:[#allocation4 + $0x8] sm:$0xff]
    %v173 = vld [vmem:[#allocation4 + $0x10] sm:$0xff]
    %v174 = vld [vmem:[#allocation4 + $0x18] sm:$0xff]
    %v175 = vld [vmem:[#allocation4 + $0x20] sm:$0xff]
    %v176 = vld [vmem:[#allocation4 + $0x28] sm:$0xff]
    %v177 = vld [vmem:[#allocation4 + $0x30] sm:$0xff]
    %v178 = vld [vmem:[#allocation4 + $0x38] sm:$0xff]
    %v179 = vld [vmem:[#allocation4 + $0x40] sm:$0xff]
    %v180 = vld [vmem:[#allocation4 + $0x48] sm:$0xff]
    %v181 = vld [vmem:[#allocation4 + $0x50] sm:$0xff]
    %v182 = vld [vmem:[#allocation4 + $0x58] sm:$0xff]
    %v183 = vld [vmem:[#allocation4 + $0x60] sm:$0xff]
    %v184 = vld [vmem:[#allocation4 + $0x68] sm:$0xff]
    %v185 = vld [vmem:[#allocation4 + $0x70] sm:$0xff]
    %v186 = vld [vmem:[#allocation4 + $0x78] sm:$0xff]
    %187 = vmatprep.subr.mxu0 0.0
    %188 = vmatpush1.msra.mxu0 %v171
    %189 = vmatprep.subr.mxu0 0.0
    %190 = vmatpush1.msra.mxu0 %v172
    %191 = vmatprep.subr.mxu0 0.0
    %192 = vmatpush1.msra.mxu0 %v173
    %193 = vmatprep.subr.mxu0 0.0
    %194 = vmatpush1.msra.mxu0 %v174
    %195 = vmatprep.subr.mxu0 0.0
    %196 = vmatpush1.msra.mxu0 %v175
    %197 = vmatprep.subr.mxu0 0.0
    %198 = vmatpush1.msra.mxu0 %v176
    %199 = vmatprep.subr.mxu0 0.0
    %200 = vmatpush1.msra.mxu0 %v177
    %201 = vmatprep.subr.mxu0 0.0
    %202 = vmatpush1.msra.mxu0 %v178
    %203 = vmatprep.subr.mxu0 0.0
    %204 = vmatpush1.msra.mxu0 %v179
    %205 = vmatprep.subr.mxu0 0.0
    %206 = vmatpush1.msra.mxu0 %v180
    %207 = vmatprep.subr.mxu0 0.0
    %208 = vmatpush1.msra.mxu0 %v181
    %209 = vmatprep.subr.mxu0 0.0
    %210 = vmatpush1.msra.mxu0 %v182
    %211 = vmatprep.subr.mxu0 0.0
    %212 = vmatpush1.msra.mxu0 %v183
    %213 = vmatprep.subr.mxu0 0.0
    %214 = vmatpush1.msra.mxu0 %v184
    %215 = vmatprep.subr.mxu0 0.0
    %216 = vmatpush1.msra.mxu0 %v185
    %217 = vmatprep.subr.mxu0 0.0
    %218 = vmatpush1.msra.mxu0 %v186
    %219 = vmatprep.subr.mxu0 0.0
    %220 = vmatpush1.msra.mxu0 0.0
    %221 = vmatprep.subr.mxu0 0.0
    %222 = vmatpush1.msra.mxu0 0.0
    %223 = vmatprep.subr.mxu0 0.0
    %224 = vmatpush1.msra.mxu0 0.0
    %225 = vmatprep.subr.mxu0 0.0
    %226 = vmatpush1.msra.mxu0 0.0
    %227 = vmatprep.subr.mxu0 0.0
    %228 = vmatpush1.msra.mxu0 0.0
    %229 = vmatprep.subr.mxu0 0.0
    %230 = vmatpush1.msra.mxu0 0.0
    %231 = vmatprep.subr.mxu0 0.0
    %232 = vmatpush1.msra.mxu0 0.0
    %233 = vmatprep.subr.mxu0 0.0
    %234 = vmatpush1.msra.mxu0 0.0
    %235 = vmatprep.subr.mxu0 0.0
    %236 = vmatpush1.msra.mxu0 0.0
    %237 = vmatprep.subr.mxu0 0.0
    %238 = vmatpush1.msra.mxu0 0.0
    %239 = vmatprep.subr.mxu0 0.0
    %240 = vmatpush1.msra.mxu0 0.0
    %241 = vmatprep.subr.mxu0 0.0
    %242 = vmatpush1.msra.mxu0 0.0
    %243 = vmatprep.subr.mxu0 0.0
    %244 = vmatpush1.msra.mxu0 0.0
    %245 = vmatprep.subr.mxu0 0.0
    %246 = vmatpush1.msra.mxu0 0.0
    %247 = vmatprep.subr.mxu0 0.0
    %248 = vmatpush1.msra.mxu0 0.0
    %249 = vmatprep.subr.mxu0 0.0
    %250 = vmatpush1.msra.mxu0 0.0
    %251 = vmatprep.mubr.f32.mxu0 0.0
    %252 = vmatmul.mubr.f32.gmra.mrb[0].mxu0 %v170
    %v253 = vpop.f32.mrb[0].mxu0
    %v254 = vadd.f32 0.0, %v253
    %v255 = vpop.f32.mrb[0].mxu0
    %256 = vdwg.mxu0
    %vm257 = vcmp.lt.f32.partialorder %v170, %v254
    %v258 = vsel %vm257, 0.0, %v169
    %v259 = vld [vmem:[#allocation6] sm:$0xff]
    %v260 = vld [vmem:[#allocation6 + $0x8] sm:$0xff]
    %v261 = vld [vmem:[#allocation6 + $0x10] sm:$0xff]
    %v262 = vld [vmem:[#allocation6 + $0x18] sm:$0xff]
    %v263 = vld [vmem:[#allocation6 + $0x20] sm:$0xff]
    %v264 = vld [vmem:[#allocation6 + $0x28] sm:$0xff]
    %v265 = vld [vmem:[#allocation6 + $0x30] sm:$0xff]
    %v266 = vld [vmem:[#allocation6 + $0x38] sm:$0xff]
    %v267 = vld [vmem:[#allocation6 + $0x40] sm:$0xff]
    %v268 = vld [vmem:[#allocation6 + $0x48] sm:$0xff]
    %v269 = vld [vmem:[#allocation6 + $0x50] sm:$0xff]
    %v270 = vld [vmem:[#allocation6 + $0x58] sm:$0xff]
    %v271 = vld [vmem:[#allocation6 + $0x60] sm:$0xff]
    %v272 = vld [vmem:[#allocation6 + $0x68] sm:$0xff]
    %v273 = vld [vmem:[#allocation6 + $0x70] sm:$0xff]
    %v274 = vld [vmem:[#allocation6 + $0x78] sm:$0xff]
    %275 = vmatprep.subr.mxu0 0.0
    %276 = vmatpush1.msra.mxu0 %v259
    %277 = vmatprep.subr.mxu0 0.0
    %278 = vmatpush1.msra.mxu0 %v260
    %279 = vmatprep.subr.mxu0 0.0
    %280 = vmatpush1.msra.mxu0 %v261
    %281 = vmatprep.subr.mxu0 0.0
    %282 = vmatpush1.msra.mxu0 %v262
    %283 = vmatprep.subr.mxu0 0.0
    %284 = vmatpush1.msra.mxu0 %v263
    %285 = vmatprep.subr.mxu0 0.0
    %286 = vmatpush1.msra.mxu0 %v264
    %287 = vmatprep.subr.mxu0 0.0
    %288 = vmatpush1.msra.mxu0 %v265
    %289 = vmatprep.subr.mxu0 0.0
    %290 = vmatpush1.msra.mxu0 %v266
    %291 = vmatprep.subr.mxu0 0.0
    %292 = vmatpush1.msra.mxu0 %v267
    %293 = vmatprep.subr.mxu0 0.0
    %294 = vmatpush1.msra.mxu0 %v268
    %295 = vmatprep.subr.mxu0 0.0
    %296 = vmatpush1.msra.mxu0 %v269
    %297 = vmatprep.subr.mxu0 0.0
    %298 = vmatpush1.msra.mxu0 %v270
    %299 = vmatprep.subr.mxu0 0.0
    %300 = vmatpush1.msra.mxu0 %v271
    %301 = vmatprep.subr.mxu0 0.0
    %302 = vmatpush1.msra.mxu0 %v272
    %303 = vmatprep.subr.mxu0 0.0
    %304 = vmatpush1.msra.mxu0 %v273
    %305 = vmatprep.subr.mxu0 0.0
    %306 = vmatpush1.msra.mxu0 %v274
    %307 = vmatprep.subr.mxu0 0.0
    %308 = vmatpush1.msra.mxu0 0.0
    %309 = vmatprep.subr.mxu0 0.0
    %310 = vmatpush1.msra.mxu0 0.0
    %311 = vmatprep.subr.mxu0 0.0
    %312 = vmatpush1.msra.mxu0 0.0
    %313 = vmatprep.subr.mxu0 0.0
    %314 = vmatpush1.msra.mxu0 0.0
    %315 = vmatprep.subr.mxu0 0.0
    %316 = vmatpush1.msra.mxu0 0.0
    %317 = vmatprep.subr.mxu0 0.0
    %318 = vmatpush1.msra.mxu0 0.0
    %319 = vmatprep.subr.mxu0 0.0
    %320 = vmatpush1.msra.mxu0 0.0
    %321 = vmatprep.subr.mxu0 0.0
    %322 = vmatpush1.msra.mxu0 0.0
    %323 = vmatprep.subr.mxu0 0.0
    %324 = vmatpush1.msra.mxu0 0.0
    %325 = vmatprep.subr.mxu0 0.0
    %326 = vmatpush1.msra.mxu0 0.0
    %327 = vmatprep.subr.mxu0 0.0
    %328 = vmatpush1.msra.mxu0 0.0
    %329 = vmatprep.subr.mxu0 0.0
    %330 = vmatpush1.msra.mxu0 0.0
    %331 = vmatprep.subr.mxu0 0.0
    %332 = vmatpush1.msra.mxu0 0.0
    %333 = vmatprep.subr.mxu0 0.0
    %334 = vmatpush1.msra.mxu0 0.0
    %335 = vmatprep.subr.mxu0 0.0
    %336 = vmatpush1.msra.mxu0 0.0
    %337 = vmatprep.subr.mxu0 0.0
    %338 = vmatpush1.msra.mxu0 0.0
    %339 = vmatprep.mubr.f32.mxu0 0.0
    %340 = vmatmul.mubr.f32.gmra.mrb[0].mxu0 %v258
    %v341 = vpop.f32.mrb[0].mxu0
    %v342 = vadd.f32 0.0, %v341
    %v343 = vpop.f32.mrb[0].mxu0
    %344 = vdwg.mxu0
    %345 = vst [vmem:[%s4] sm:$0xff] %v342
    // Predicated region
    $region30: #{forward.1} parent=1 // pred_check
      _
    $region31: #{forward.1} parent=1 // pred_check_branch
      %347 = sbr.rel (0) target = $region33
    $region32: #{forward.1} parent=1 // pred_region
      _
    $region33: #{forward.1} parent=1 // pred_fallthru
      _
    // Predicated region
    $region34: #{forward.1} parent=1 // pred_check
      _
    $region35: #{forward.1} parent=1 // pred_check_branch
      %349 = sbr.rel (0) target = $region37
    $region36: #{forward.1} parent=1 // pred_region
      _
    $region37: #{forward.1} parent=1 // pred_fallthru
      _
    %350 = vsyncpa [#allocation3], 1
    %351 = vsyncpa [#allocation5], 1

</llo_original>
